<compile_context>
chip_gen: v7x
topology: tpu7x:2x2x1
jax: 0.10.0
libtpu: 0.0.40
codegen_flags: <defaults>
</compile_context>

<pallas_src>
import jax
import jax.numpy as jnp
from jax.experimental import pallas as pl
from jax.experimental.pallas import tpu as pltpu


def _round_up(n, m):
    return ((n + m - 1) // m) * m


def final_layer_kernel(x_ref, mod_ref, wlin_ref, blin_ref, o_ref):
    # x_ref:    (1, tT, H)
    # mod_ref:  (1, 2, H)   row 0 = shift, row 1 = (1 + scale)   (f32)
    # wlin_ref: (H, O)      matmul dtype (bf16)
    # blin_ref: (1, O)      f32
    # o_ref:    (1, tT, O)
    x = x_ref[0].astype(jnp.float32)                      # (tT, H)

    # LayerNorm (no affine, eps=1e-6) over the feature dim, in f32.
    mean = jnp.mean(x, axis=-1, keepdims=True)
    xc = x - mean
    var = jnp.mean(xc * xc, axis=-1, keepdims=True)
    x_norm = xc * jax.lax.rsqrt(var + 1e-6)

    # modulate: x * (1 + scale) + shift, broadcast over tokens.
    shift = mod_ref[0, 0:1, :]                            # (1, H)
    scale1 = mod_ref[0, 1:2, :]                           # (1, H)
    y = x_norm * scale1 + shift                           # (tT, H) f32

    # Final linear projection: bf16 operands on the MXU, f32 accumulation.
    out = jnp.dot(y.astype(wlin_ref.dtype), wlin_ref[...],
                  preferred_element_type=jnp.float32) + blin_ref[...]
    o_ref[0] = out.astype(o_ref.dtype)


def final_layer(x, c, w_mod, b_mod, w_lin, b_lin, *,
                t_tile=None, matmul_dtype=jnp.bfloat16, out_dtype=None):
    """x: (B, T, H), c: (B, H). Weights stored as (in, out) so y = act @ W + b."""
    B, T, H = x.shape
    O = w_lin.shape[1]
    out_dtype = x.dtype if out_dtype is None else out_dtype

    # ---- adaLN modulation in the wrapper: one batched (B,H)@(H,2H) matmul ----
    cf = c.astype(jnp.float32)
    silu_c = cf * jax.nn.sigmoid(cf)
    mod = silu_c @ w_mod.astype(jnp.float32) + b_mod.astype(jnp.float32)   # (B, 2H)
    # Fused (B, 2, H): row 0 = shift, row 1 = hoisted (1 + scale).
    mod_params = jnp.stack([mod[:, :H], 1.0 + mod[:, H:]], axis=1)

    # MXU operands: weights in bf16 (no-op cast if already stored bf16).
    # For production, store the weight pre-cast so this is not a per-call op.
    w_lin_k = w_lin.astype(matmul_dtype)
    b_lin_k = b_lin.astype(jnp.float32).reshape(1, O)

    # ---- token tile selection ----
    if t_tile is None:
        t_tile = T if T <= 1024 else 1024
        if t_tile < T:
            # Prefer a multiple-of-8 divisor of T (avoids a partial tail block).
            for cand in range(t_tile, t_tile // 2 - 1, -8):
                if T % cand == 0:
                    t_tile = cand
                    break
        # v7x has 2 TensorCores: avoid a 1x1 grid when there is work to split.
        if B == 1 and t_tile >= T and T >= 16:
            t_tile = _round_up(pl.cdiv(T, 2), 8)
    tT = min(t_tile, T)
    n_t = pl.cdiv(T, tT)

    # ---- VMEM budget (double-buffered x/out blocks, resident weights) ----
    x_item = jnp.dtype(x.dtype).itemsize
    o_item = jnp.dtype(out_dtype).itemsize
    w_item = jnp.dtype(matmul_dtype).itemsize
    vmem_need = (2 * tT * H * x_item           # x blocks (double-buffered)
                 + 2 * tT * O * o_item         # out blocks
                 + H * O * w_item              # resident weight
                 + 2 * 2 * H * 4 + O * 4)      # mod params + bias
    # Cap at 48 MiB: comfortable headroom under v7x's 64 MiB per-TC VMEM.
    vmem_limit = min(max(int(1.5 * vmem_need) + (2 << 20), 8 << 20), 48 << 20)

    cost = pl.CostEstimate(
        flops=2 * B * T * H * O,
        transcendentals=0,
        bytes_accessed=(B * T * H * x_item       # read x
                        + B * T * O * o_item     # write out
                        + H * O * w_item         # weight
                        + B * 2 * H * 4 + O * 4))

    return pl.pallas_call(
        final_layer_kernel,
        out_shape=jax.ShapeDtypeStruct((B, T, O), out_dtype),
        grid_spec=pltpu.PrefetchScalarGridSpec(
            num_scalar_prefetch=0,
            grid=(B, n_t),
            in_specs=[
                pl.BlockSpec((1, tT, H), lambda b, t: (b, t, 0)),   # x
                pl.BlockSpec((1, 2, H), lambda b, t: (b, 0, 0)),    # shift / 1+scale
                pl.BlockSpec((H, O), lambda b, t: (0, 0)),          # w_lin (resident)
                pl.BlockSpec((1, O), lambda b, t: (0, 0)),          # b_lin (resident)
            ],
            out_specs=pl.BlockSpec((1, tT, O), lambda b, t: (b, t, 0)),
        ),
        compiler_params=pltpu.CompilerParams(
            dimension_semantics=("parallel", "parallel"),
            vmem_limit_bytes=vmem_limit),
        cost_estimate=cost,
    )(x, mod_params, w_lin_k, b_lin_k)


def reference(x, c, w_mod, b_mod, w_lin, b_lin):
    silu_c = c * jax.nn.sigmoid(c)
    mod = silu_c @ w_mod + b_mod
    H = x.shape[-1]
    shift, scale = mod[:, :H], mod[:, H:]
    mean = jnp.mean(x, axis=-1, keepdims=True)
    var = jnp.mean((x - mean) ** 2, axis=-1, keepdims=True)
    xn = (x - mean) / jnp.sqrt(var + 1e-6)
    y = xn * (1.0 + scale[:, None, :]) + shift[:, None, :]
    return y @ w_lin + b_lin


if __name__ == "__main__":
    B, T = 2, 8
    hidden_size = 32
    patch_size = 2
    out_channels = 4
    O = patch_size * patch_size * out_channels

    key = jax.random.PRNGKey(0)
    kx, kc, k1, k2, k3, k4 = jax.random.split(key, 6)

    x = jax.random.normal(kx, (B, T, hidden_size), dtype=jnp.float32)
    c = jax.random.normal(kc, (B, hidden_size), dtype=jnp.float32)

    # Deterministic parameter init (stored as (in, out) for y = act @ W + b).
    w_mod = jax.random.normal(k1, (hidden_size, 2 * hidden_size), jnp.float32) * 0.02
    b_mod = jax.random.normal(k2, (2 * hidden_size,), jnp.float32) * 0.02
    w_lin = jax.random.normal(k3, (hidden_size, O), jnp.float32) * 0.02
    b_lin = jax.random.normal(k4, (O,), jnp.float32) * 0.02

    out = final_layer(x, c, w_mod, b_mod, w_lin, b_lin)
    out = jax.block_until_ready(out)

    ref = reference(x, c, w_mod, b_mod, w_lin, b_lin)
    assert out.shape == (B, T, O)
    # Tolerance accounts for the bf16 MXU projection (LN/modulate stay f32).
    assert jnp.allclose(out.astype(jnp.float32), ref, atol=2e-3, rtol=2e-3), (
        float(jnp.max(jnp.abs(out.astype(jnp.float32) - ref))))
    print("KERNEL_OK")
</pallas_src>

<mosaic_0001>
module attributes {stable_mosaic.version = 11 : i64} {
  func.func @final_layer_kernel(%arg0: i32, %arg1: i32, %arg2: memref<1x8x32xf32, #tpu.memory_space<vmem>>, %arg3: memref<1x2x32xf32, #tpu.memory_space<vmem>>, %arg4: memref<32x16xbf16, #tpu.memory_space<vmem>>, %arg5: memref<1x16xf32, #tpu.memory_space<vmem>>, %arg6: memref<1x8x16xf32, #tpu.memory_space<vmem>>) attributes {dimension_semantics = [#tpu.dimension_semantics<parallel>, #tpu.dimension_semantics<parallel>], iteration_bounds = array<i64: 2, 1>, scalar_prefetch = 0 : i64, scratch_operands = 0 : i64, tpu.core_type = #tpu.core_type<tc>, window_params = [{transform_indices = @transform_0, window_bounds = array<i64: 1, 8, 32>}, {transform_indices = @transform_1, window_bounds = array<i64: 1, 2, 32>}, {pipeline_mode = #tpu.pipeline_mode<synchronous>, transform_indices = @transform_2, window_bounds = array<i64: 32, 16>}, {pipeline_mode = #tpu.pipeline_mode<synchronous>, transform_indices = @transform_3, window_bounds = array<i64: 1, 16>}, {transform_indices = @transform_4, window_bounds = array<i64: 1, 8, 16>}]} {
    %c0 = arith.constant 0 : index
    %c0_0 = arith.constant 0 : index
    %c0_1 = arith.constant 0 : index
    %0 = vector.load %arg2[%c0, %c0_0, %c0_1] : memref<1x8x32xf32, #tpu.memory_space<vmem>>, vector<1x8x32xf32>
    %1 = vector.shape_cast %0 : vector<1x8x32xf32> to vector<8x32xf32>
    %cst = arith.constant dense<0.000000e+00> : vector<8xf32>
    %2 = vector.multi_reduction <add>, %1, %cst [1] : vector<8x32xf32> to vector<8xf32>
    %3 = vector.shape_cast %2 : vector<8xf32> to vector<8x1xf32>
    %cst_2 = arith.constant 3.200000e+01 : f32
    %4 = vector.broadcast %cst_2 : f32 to vector<8x1xf32>
    %5 = arith.divf %3, %4 : vector<8x1xf32>
    %6 = vector.broadcast %5 : vector<8x1xf32> to vector<8x32xf32>
    %7 = arith.subf %1, %6 : vector<8x32xf32>
    %8 = arith.mulf %7, %7 : vector<8x32xf32>
    %cst_3 = arith.constant dense<0.000000e+00> : vector<8xf32>
    %9 = vector.multi_reduction <add>, %8, %cst_3 [1] : vector<8x32xf32> to vector<8xf32>
    %10 = vector.shape_cast %9 : vector<8xf32> to vector<8x1xf32>
    %cst_4 = arith.constant 3.200000e+01 : f32
    %11 = vector.broadcast %cst_4 : f32 to vector<8x1xf32>
    %12 = arith.divf %10, %11 : vector<8x1xf32>
    %cst_5 = arith.constant 9.99999997E-7 : f32
    %13 = vector.broadcast %cst_5 : f32 to vector<8x1xf32>
    %14 = arith.addf %12, %13 : vector<8x1xf32>
    %15 = math.rsqrt %14 : vector<8x1xf32>
    %16 = vector.broadcast %15 : vector<8x1xf32> to vector<8x32xf32>
    %17 = arith.mulf %7, %16 : vector<8x32xf32>
    %c0_6 = arith.constant 0 : index
    %c0_7 = arith.constant 0 : index
    %c0_8 = arith.constant 0 : index
    %18 = vector.load %arg3[%c0_6, %c0_7, %c0_8] : memref<1x2x32xf32, #tpu.memory_space<vmem>>, vector<1x1x32xf32>
    %19 = vector.shape_cast %18 : vector<1x1x32xf32> to vector<1x32xf32>
    %c0_9 = arith.constant 0 : index
    %c1 = arith.constant 1 : index
    %c0_10 = arith.constant 0 : index
    %20 = vector.load %arg3[%c0_9, %c1, %c0_10] : memref<1x2x32xf32, #tpu.memory_space<vmem>>, vector<1x1x32xf32>
    %21 = vector.shape_cast %20 : vector<1x1x32xf32> to vector<1x32xf32>
    %22 = vector.broadcast %21 : vector<1x32xf32> to vector<8x32xf32>
    %23 = arith.mulf %17, %22 : vector<8x32xf32>
    %24 = vector.broadcast %19 : vector<1x32xf32> to vector<8x32xf32>
    %25 = arith.addf %23, %24 : vector<8x32xf32>
    %26 = arith.truncf %25 : vector<8x32xf32> to vector<8x32xbf16>
    %c0_11 = arith.constant 0 : index
    %c0_12 = arith.constant 0 : index
    %27 = vector.load %arg4[%c0_11, %c0_12] : memref<32x16xbf16, #tpu.memory_space<vmem>>, vector<32x16xbf16>
    %cst_13 = arith.constant dense<0.000000e+00> : vector<8x16xf32>
    %28 = tpu.matmul %26, %27, %cst_13 {dimension_numbers = #tpu.dot_dimension_numbers<[1], [0], [0], [1], [0, 0, 1, 1], [], []>} : vector<8x32xbf16>, vector<32x16xbf16>, vector<8x16xf32> -> vector<8x16xf32>
    %c0_14 = arith.constant 0 : index
    %c0_15 = arith.constant 0 : index
    %29 = vector.load %arg5[%c0_14, %c0_15] : memref<1x16xf32, #tpu.memory_space<vmem>>, vector<1x16xf32>
    %30 = vector.broadcast %29 : vector<1x16xf32> to vector<8x16xf32>
    %31 = arith.addf %28, %30 : vector<8x16xf32>
    %c0_16 = arith.constant 0 : index
    %c0_17 = arith.constant 0 : index
    %c0_18 = arith.constant 0 : index
    %32 = vector.load %arg6[%c0_16, %c0_17, %c0_18] : memref<1x8x16xf32, #tpu.memory_space<vmem>>, vector<1x8x16xf32>
    %33 = vector.shape_cast %32 : vector<1x8x16xf32> to vector<8x16xf32>
    %34 = vector.shape_cast %31 : vector<8x16xf32> to vector<1x8x16xf32>
    tpu.vector_store %arg6[%c0_16, %c0_17, %c0_18], %34 {strides = array<i32>} : memref<1x8x16xf32, #tpu.memory_space<vmem>>, vector<1x8x16xf32>,
    return
  }
  func.func @transform_0(%arg0: i32, %arg1: i32) -> (i32, i32, i32) {
    %c0_i32 = arith.constant 0 : i32
    %c0_i32_0 = arith.constant 0 : i32
    return %arg0, %arg1, %c0_i32 : i32, i32, i32
  }
  func.func @transform_1(%arg0: i32, %arg1: i32) -> (i32, i32, i32) {
    %c0_i32 = arith.constant 0 : i32
    %c0_i32_0 = arith.constant 0 : i32
    %c0_i32_1 = arith.constant 0 : i32
    return %arg0, %c0_i32, %c0_i32_0 : i32, i32, i32
  }
  func.func @transform_2(%arg0: i32, %arg1: i32) -> (i32, i32) {
    %c0_i32 = arith.constant 0 : i32
    %c0_i32_0 = arith.constant 0 : i32
    %c0_i32_1 = arith.constant 0 : i32
    return %c0_i32, %c0_i32_0 : i32, i32
  }
  func.func @transform_3(%arg0: i32, %arg1: i32) -> (i32, i32) {
    %c0_i32 = arith.constant 0 : i32
    %c0_i32_0 = arith.constant 0 : i32
    %c0_i32_1 = arith.constant 0 : i32
    return %c0_i32, %c0_i32_0 : i32, i32
  }
  func.func @transform_4(%arg0: i32, %arg1: i32) -> (i32, i32, i32) {
    %c0_i32 = arith.constant 0 : i32
    %c0_i32_0 = arith.constant 0 : i32
    return %arg0, %arg1, %c0_i32 : i32, i32, i32
  }
}

</mosaic_0001>

<llo_original>
// kernel: tpu_custom_call.1
$region0: #{tpu_custom_call.1}
  #allocation0 [shape = 'u32[]', space=smem, size = 0x4, offset = 0x4, fixed_abs, tag = 'smem constant byte address 0x4 - core index']
  #allocation1 [shape = 'u32[144,128]{1,0:T(1,128)}', space=vmem, size = 0x12000, scoped, tag = 'internal scratch']
  %s0 = inlined_call_operand.vmem [shape: f32[2,8,32], index: 0, kind: input, shape index: {}]
  %s1 = inlined_call_operand.vmem [shape: f32[2,2,32], index: 1, kind: input, shape index: {}]
  %s2 = inlined_call_operand.vmem [shape: bf16[32,16], index: 2, kind: input, shape index: {}]
  %s3 = inlined_call_operand.vmem [shape: f32[1,16], index: 3, kind: input, shape index: {}]
  %s4 = inlined_call_operand.hbm [shape: f32[2,8,16], index: 4, kind: output, shape index: {}]
  %s5 = sld [smem:[#allocation0]]
  $region49: #{tpu_custom_call.1} parent=0
    _
  %s7 = ssub.s32 1, %s5
  %s8 = scalar_select 0, %s7, %s5
  $region1: #{tpu_custom_call.1} parent=0
    #allocation2 [shape = 'u8[8192]{0}', space=vmem, size = 0x2000, scoped, tag = 'output window, operand 0']
    #allocation3 [shape = 's32[2]{0}', space=sflag, size = 0x8, scoped, tag = 'scoped memory for tpu_custom_call.1']
    %9 = vsyncpa [#allocation3], 0
    %s10 = scalar_lea.sflag [#allocation3], 1
    %11 = vsyncpa %s10, 0
    loop: start=0, step=1, limit=4
    $region2: #{tpu_custom_call.1} parent=1 // loop_pre_header
      _
    $region3: #{tpu_custom_call.1} parent=1 // loop_header
      %s13 = sphi 0, %s17
      %p14 = scmp.ge.s32.totalorder %s13, 4
      %s20 = sphi 0, %s32
      %s21 = sphi 0, %s28
      %s22 = sphi 0, %s20
      %s23 = sphi 0, %s21
      %s24 = sphi 0, %s22
      %s25 = sphi 0, %s23
      %s37 = sphi 0, %s39
      %s40 = sphi 0, %s37
      %s41 = sphi 0, %s40
      %s57 = sphi 0, %s41
      %s63 = sphi 0, %s65
      %s66 = sphi 0, %s63
      %s67 = sphi 0, %s66
      %s83 = sphi 0, %s67
      %s87 = sphi 0, %s87
      %s89 = sphi 0, %s87
      %s90 = sphi 0, %s89
      %s104 = sphi 0, %s90
      %s108 = sphi 0, %s108
      %s110 = sphi 0, %s108
      %s111 = sphi 0, %s110
      %s125 = sphi 0, %s111
      %s133 = sphi 0, %s135
      %s136 = sphi 0, %s133
      %s137 = sphi 0, %s136
      %s153 = sphi 0, %s137
    $region4: #{tpu_custom_call.1} parent=1 // loop_header_branch
      %16 = sbr.rel (%p14) target = $region8
    $region5: #{tpu_custom_call.1} parent=1 // loop_body
      %s18 = ssub.s32 %s13, 1
      %s19 = ssub.s32 %s13, 2
      %s26 = sadd.s32 1, %s21
      %p27 = scmp.ge.s32.totalorder %s26, 1
      %s28 = scalar_select %p27, 0, %s26
      %s29 = sadd.s32 1, %s20
      %s30 = scalar_select %p27, %s29, %s20
      %p31 = scmp.ge.s32.totalorder %s30, 2
      %s32 = scalar_select %p31, 0, %s30
      %s33 = ssub.s32 %s20, %s32
      %s34 = ssub.s32 %s21, %s28
      %s35 = sor.u32 %s33, %s34
      %p36 = scmp.eq.s32.totalorder %s35, 0
      %s38 = sadd.s32 %s37, 1
      %s39 = scalar_select %p36, %s37, %s38
      %p42 = pneg %p36
      %p43 = scmp.eq.s32.totalorder %s13, 1
      %p44 = por %p42, %p43
      %p45 = scmp.ne.s32.totalorder %s37, %s40
      %p46 = scmp.eq.s32.totalorder %s13, 0
      %p47 = por %p45, %p46
      %p48 = scmp.ne.s32.totalorder %s37, %s40
      %p49 = scmp.eq.s32.totalorder %s18, 1
      %p50 = por %p48, %p49
      %p51 = scmp.ne.s32.totalorder %s40, %s41
      %p52 = scmp.eq.s32.totalorder %s18, 0
      %p53 = por %p51, %p52
      %p54 = scmp.ne.s32.totalorder %s40, %s41
      %p55 = scmp.eq.s32.totalorder %s19, 1
      %p56 = por %p54, %p55
      %p58 = scmp.ne.s32.totalorder %s41, %s57
      %p59 = scmp.eq.s32.totalorder %s19, 0
      %p60 = por %p58, %p59
      %s61 = ssub.s32 %s20, %s32
      %p62 = scmp.eq.s32.totalorder %s61, 0
      %s64 = sadd.s32 %s63, 1
      %s65 = scalar_select %p62, %s63, %s64
      %p68 = pneg %p62
      %p69 = scmp.eq.s32.totalorder %s13, 1
      %p70 = por %p68, %p69
      %p71 = scmp.ne.s32.totalorder %s63, %s66
      %p72 = scmp.eq.s32.totalorder %s13, 0
      %p73 = por %p71, %p72
      %p74 = scmp.ne.s32.totalorder %s63, %s66
      %p75 = scmp.eq.s32.totalorder %s18, 1
      %p76 = por %p74, %p75
      %p77 = scmp.ne.s32.totalorder %s66, %s67
      %p78 = scmp.eq.s32.totalorder %s18, 0
      %p79 = por %p77, %p78
      %p80 = scmp.ne.s32.totalorder %s66, %s67
      %p81 = scmp.eq.s32.totalorder %s19, 1
      %p82 = por %p80, %p81
      %p84 = scmp.ne.s32.totalorder %s67, %s83
      %p85 = scmp.eq.s32.totalorder %s19, 0
      %p86 = por %p84, %p85
      %s88 = sadd.s32 %s87, 1
      %p91 = scmp.eq.s32.totalorder %s13, 1
      %p92 = scmp.ne.s32.totalorder %s87, %s89
      %p93 = scmp.eq.s32.totalorder %s13, 0
      %p94 = por %p92, %p93
      %p95 = scmp.ne.s32.totalorder %s87, %s89
      %p96 = scmp.eq.s32.totalorder %s18, 1
      %p97 = por %p95, %p96
      %p98 = scmp.ne.s32.totalorder %s89, %s90
      %p99 = scmp.eq.s32.totalorder %s18, 0
      %p100 = por %p98, %p99
      %p101 = scmp.ne.s32.totalorder %s89, %s90
      %p102 = scmp.eq.s32.totalorder %s19, 1
      %p103 = por %p101, %p102
      %p105 = scmp.ne.s32.totalorder %s90, %s104
      %p106 = scmp.eq.s32.totalorder %s19, 0
      %p107 = por %p105, %p106
      %s109 = sadd.s32 %s108, 1
      %p112 = scmp.eq.s32.totalorder %s13, 1
      %p113 = scmp.ne.s32.totalorder %s108, %s110
      %p114 = scmp.eq.s32.totalorder %s13, 0
      %p115 = por %p113, %p114
      %p116 = scmp.ne.s32.totalorder %s108, %s110
      %p117 = scmp.eq.s32.totalorder %s18, 1
      %p118 = por %p116, %p117
      %p119 = scmp.ne.s32.totalorder %s110, %s111
      %p120 = scmp.eq.s32.totalorder %s18, 0
      %p121 = por %p119, %p120
      %p122 = scmp.ne.s32.totalorder %s110, %s111
      %p123 = scmp.eq.s32.totalorder %s19, 1
      %p124 = por %p122, %p123
      %p126 = scmp.ne.s32.totalorder %s111, %s125
      %p127 = scmp.eq.s32.totalorder %s19, 0
      %p128 = por %p126, %p127
      %s129 = ssub.s32 %s20, %s32
      %s130 = ssub.s32 %s21, %s28
      %s131 = sor.u32 %s129, %s130
      %p132 = scmp.eq.s32.totalorder %s131, 0
      %s134 = sadd.s32 %s133, 1
      %s135 = scalar_select %p132, %s133, %s134
      %p138 = pneg %p132
      %p139 = scmp.eq.s32.totalorder %s13, 1
      %p140 = por %p138, %p139
      %p141 = scmp.ne.s32.totalorder %s133, %s136
      %p142 = scmp.eq.s32.totalorder %s13, 0
      %p143 = por %p141, %p142
      %p144 = scmp.ne.s32.totalorder %s133, %s136
      %p145 = scmp.eq.s32.totalorder %s18, 1
      %p146 = por %p144, %p145
      %p147 = scmp.ne.s32.totalorder %s136, %s137
      %p148 = scmp.eq.s32.totalorder %s18, 0
      %p149 = por %p147, %p148
      %p150 = scmp.ne.s32.totalorder %s136, %s137
      %p151 = scmp.eq.s32.totalorder %s19, 1
      %p152 = por %p150, %p151
      %p154 = scmp.ne.s32.totalorder %s137, %s153
      %p155 = scmp.eq.s32.totalorder %s19, 0
      %p156 = por %p154, %p155
      %p157 = scmp.le.s32.totalorder 1, %s13
      %p158 = scmp.lt.s32.totalorder %s13, 3
      %p159 = pnand %p157, %p158
      %p160 = pneg %p159
      // Predicated region
      $region9: #{tpu_custom_call.1} parent=5 // pred_check
        _
      $region10: #{tpu_custom_call.1} parent=5 // pred_check_branch
        %162 = sbr.rel (%p159) target = $region12
      $region11: #{tpu_custom_call.1} parent=5 // pred_region
        %s163 = ssub.s32 %s13, 1
        // Predicated region
        $region13: #{tpu_custom_call.1} parent=11 // pred_check
          %p164 = pneg %p100
        $region14: #{tpu_custom_call.1} parent=11 // pred_check_branch
          %166 = sbr.rel (%p164) target = $region16
        $region15: #{tpu_custom_call.1} parent=11 // pred_region
          _
        $region16: #{tpu_custom_call.1} parent=11 // pred_fallthru
          _
        // Predicated region
        $region17: #{tpu_custom_call.1} parent=11 // pred_check
          %p167 = pneg %p121
        $region18: #{tpu_custom_call.1} parent=11 // pred_check_branch
          %169 = sbr.rel (%p167) target = $region20
        $region19: #{tpu_custom_call.1} parent=11 // pred_region
          _
        $region20: #{tpu_custom_call.1} parent=11 // pred_fallthru
          _
      $region12: #{tpu_custom_call.1} parent=5 // pred_fallthru
        _
      %p170 = scmp.lt.s32.totalorder %s13, 2
      // Predicated region
      $region21: #{tpu_custom_call.1} parent=5 // pred_check
        %p171 = pneg %p170
      $region22: #{tpu_custom_call.1} parent=5 // pred_check_branch
        %173 = sbr.rel (%p171) target = $region24
      $region23: #{tpu_custom_call.1} parent=5 // pred_region
        // Predicated region
        $region25: #{tpu_custom_call.1} parent=23 // pred_check
          %p174 = pneg %p47
        $region26: #{tpu_custom_call.1} parent=23 // pred_check_branch
          %176 = sbr.rel (%p174) target = $region28
        $region27: #{tpu_custom_call.1} parent=23 // pred_region
          %p177 = scmp.lt.s32.totalorder %s20, 1
          %s178 = scalar_select %p177, %s20, 1
          %p179 = scmp.lt.s32.totalorder %s21, 0
          %s180 = scalar_select %p179, %s21, 0
          %s181 = sadd.s32 %s180, %s178
          %s182 = smul.addr %s181, 8
          %s183 = scalar_lea.vmem %s0, %s182
        $region28: #{tpu_custom_call.1} parent=23 // pred_fallthru
          _
        // Predicated region
        $region29: #{tpu_custom_call.1} parent=23 // pred_check
          %p184 = pneg %p73
        $region30: #{tpu_custom_call.1} parent=23 // pred_check_branch
          %186 = sbr.rel (%p184) target = $region32
        $region31: #{tpu_custom_call.1} parent=23 // pred_region
          %p187 = scmp.lt.s32.totalorder %s20, 1
          %s188 = scalar_select %p187, %s20, 1
          %s189 = smul.addr %s188, 2
          %s190 = scalar_lea.vmem %s1, %s189
        $region32: #{tpu_custom_call.1} parent=23 // pred_fallthru
          _
      $region24: #{tpu_custom_call.1} parent=5 // pred_fallthru
        _
      %p191 = scmp.le.s32.totalorder 1, %s13
      %p192 = scmp.lt.s32.totalorder %s13, 3
      %p193 = pnand %p191, %p192
      %p194 = pneg %p193
      // Predicated region
      $region33: #{tpu_custom_call.1} parent=5 // pred_check
        _
      $region34: #{tpu_custom_call.1} parent=5 // pred_check_branch
        %196 = sbr.rel (%p193) target = $region36
      $region35: #{tpu_custom_call.1} parent=5 // pred_region
        %s197 = ssub.s32 %s13, 1
        %p198 = scmp.lt.s32.totalorder %s22, 1
        %s199 = scalar_select %p198, %s22, 1
        %p200 = scmp.lt.s32.totalorder %s23, 0
        %s201 = scalar_select %p200, %s23, 0
        %s202 = sadd.s32 %s201, %s199
        %s203 = smul.addr %s202, 8
        %s204 = scalar_lea.vmem %s0, %s203
        %p205 = pneg %p53
        %p206 = pneg %p50
        %p207 = scmp.lt.s32.totalorder %s22, 1
        %s208 = scalar_select %p207, %s22, 1
        %s209 = smul.addr %s208, 2
        %s210 = scalar_lea.vmem %s1, %s209
        %p211 = pneg %p79
        %p212 = pneg %p76
        %p213 = pneg %p100
        %p214 = pneg %p97
        %p215 = pneg %p121
        %p216 = pneg %p118
        %p217 = pneg %p149
        %p218 = pneg %p146
        %s219 = sand.u32 %s136, 1
        %s220 = scalar_lea.sflag [#allocation3], %s219
        %s221 = sand.u32 %s136, 1
        %s222 = smul.addr %s221, 8
        %s223 = scalar_lea.vmem [#allocation2], %s222
        %p224 = scmp.lt.s32.totalorder %s22, 1
        %s225 = scalar_select %p224, %s22, 1
        %p226 = scmp.lt.s32.totalorder %s23, 0
        %s227 = scalar_select %p226, %s23, 0
        %s228 = sadd.s32 %s227, %s225
        %s229 = smul.addr %s228, 8
        %s230 = scalar_lea.vmem %s0, %s229
        %p231 = scmp.lt.s32.totalorder %s22, 1
        %s232 = scalar_select %p231, %s22, 1
        %s233 = smul.addr %s232, 2
        %s234 = scalar_lea.vmem %s1, %s233
        %v236 = vld [vmem:[%s230] sm:$0xff]
        %vm237 = vcmask 261120
        %v238 = vsel %vm237, %v236, 0.0
        %239 = vadd.xlane.f32.xlu0 %v238
        %v240 = vpop.xlane.xlu0 %239
        %v241 = vrcp.pop 32.0
        %v242 = vmul.f32 %v240, %v241
        %v243 = vsub.f32 %v236, %v242
        %v244 = vmul.f32 %v243, %v243
        %v245 = vsel %vm237, %v244, 0.0
        %246 = vadd.xlane.f32.xlu0 %v245
        %v247 = vpop.xlane.xlu0 %246
        %v248 = vmul.f32 %v247, %v241
        %v249 = vadd.f32 %v248, 1e-06
        %v250 = vrsqrt.pop %v249
        %v251 = vmul.f32 %v243, %v250
        %v252 = vld [vmem:[%s234] sm:$0x1]
        %v253 = vld [vmem:[%s234 + $0x1] sm:$0x1]
        %v254 = vlaneseq
        %v255 = vshrl.u32 %v254, 7
        %v256 = vsub.s32 0, %v255
        %v257 = vrot.slane %v253, %v256
        %v258 = vmul.f32 %v251, %v257
        %v259 = vlaneseq
        %v260 = vshrl.u32 %v259, 7
        %v261 = vsub.s32 0, %v260
        %v262 = vrot.slane %v252, %v261
        %v263 = vadd.f32 %v258, %v262
        %v264 = vpack.c.bf16 %v263, %v263
        %v265 = vld [vmem:[%s2] sm:$0xf]
        %v266 = vld [vmem:[%s2 + $0x4] sm:$0xf]
        %v267 = vld [vmem:[%s2 + $0x8] sm:$0xf]
        %v268 = vld [vmem:[%s2 + $0xc] sm:$0xf]
        %v269 = vld [vmem:[%s3] sm:$0x1]
        %v271 = vlaneseq
        %v272 = vshrl.u32 %v271, 7
        %v273 = vsub.s32 0, %v272
        %v274 = vrot.slane %v269, %v273
        %v280 = vunpack.c.l.b16 %v265
        %v281 = vunpack.c.l.b16 %v266
        %v282 = vunpack.c.l.b16 %v267
        %v283 = vunpack.c.l.b16 %v268
        %v284 = vpack.c.b16 %v281, %v280
        %v285 = vpack.c.b16 %v283, %v282
        %v289 = vsel %vm237, %v264, 0
        %291 = vmatprep.subr.bf16.mxu0 0
        %292 = vmatpush1.bf16.msra.mxu0 %v284
        %293 = vmatprep.subr.bf16.mxu0 0
        %294 = vmatpush1.bf16.msra.mxu0 %v285
        %295 = vmatprep.subr.bf16.mxu0 0
        %296 = vmatpush1.bf16.msra.mxu0 0
        %297 = vmatprep.subr.bf16.mxu0 0
        %298 = vmatpush1.bf16.msra.mxu0 0
        %299 = vmatprep.subr.bf16.mxu0 0
        %300 = vmatpush1.bf16.msra.mxu0 0
        %301 = vmatprep.subr.bf16.mxu0 0
        %302 = vmatpush1.bf16.msra.mxu0 0
        %303 = vmatprep.subr.bf16.mxu0 0
        %304 = vmatpush1.bf16.msra.mxu0 0
        %305 = vmatprep.subr.bf16.mxu0 0
        %306 = vmatpush1.bf16.msra.mxu0 0
        %307 = vmatprep.subr.bf16.mxu0 0
        %308 = vmatpush1.bf16.msra.mxu0 0
        %309 = vmatprep.subr.bf16.mxu0 0
        %310 = vmatpush1.bf16.msra.mxu0 0
        %311 = vmatprep.subr.bf16.mxu0 0
        %312 = vmatpush1.bf16.msra.mxu0 0
        %313 = vmatprep.subr.bf16.mxu0 0
        %314 = vmatpush1.bf16.msra.mxu0 0
        %315 = vmatprep.subr.bf16.mxu0 0
        %316 = vmatpush1.bf16.msra.mxu0 0
        %317 = vmatprep.subr.bf16.mxu0 0
        %318 = vmatpush1.bf16.msra.mxu0 0
        %319 = vmatprep.subr.bf16.mxu0 0
        %320 = vmatpush1.bf16.msra.mxu0 0
        %321 = vmatprep.subr.bf16.mxu0 0
        %322 = vmatpush1.bf16.msra.mxu0 0
        %323 = vmatprep.mubr.bf16.mxu0 0
        %324 = vmatmul.mubr.bf16.gmra.mrb[0].mxu0 %v289
        %v325 = vpop.f32.mrb[0].mxu0
        %v326 = vadd.f32 %v274, %v325
        %v327 = vpop.f32.mrb[0].mxu0
        %v328 = vpop.f32.mrb[0].mxu0
        %v329 = vpop.f32.mrb[0].mxu0
        %330 = vdwg.mxu0
        %vm331 = vcmask 130048
        %332 = vst.msk [vmem:[%s223] sm:$0xff] %vm331, %v326
        %s333 = sand.u32 %s136, 1
        %s334 = scalar_lea.sflag [#allocation3], %s333
        %s335 = sand.u32 %s136, 1
        %s336 = smul.addr %s335, 8
        %s337 = scalar_lea.vmem [#allocation2], %s336
        // Predicated region
        $region37: #{tpu_custom_call.1} parent=35 // pred_check
          %p338 = pneg %p146
        $region38: #{tpu_custom_call.1} parent=35 // pred_check_branch
          %340 = sbr.rel (%p338) target = $region40
        $region39: #{tpu_custom_call.1} parent=35 // pred_region
          %s342 = ssub.s32 128, 128
          %343 = vsyncadd %s334, %s342
          %s344 = sadd.s32 %s23, %s22
          %s345 = smul.addr %s344, 128
          %s346 = scalar_lea.hbm %s4, %s345
          %s348 = sshll.u32 %s337, 4
          %s349 = int_to_ptr.vmem [resolvable:$true] %s348
          %351 = dma.vmem_to_hbm [thread:$0]  %s349, 128, %s346, %s334
        $region40: #{tpu_custom_call.1} parent=35 // pred_fallthru
          _
      $region36: #{tpu_custom_call.1} parent=5 // pred_fallthru
        _
      %p352 = scmp.le.s32.totalorder 2, %s13
      // Predicated region
      $region41: #{tpu_custom_call.1} parent=5 // pred_check
        %p353 = pneg %p352
      $region42: #{tpu_custom_call.1} parent=5 // pred_check_branch
        %355 = sbr.rel (%p353) target = $region44
      $region43: #{tpu_custom_call.1} parent=5 // pred_region
        %s356 = ssub.s32 %s13, 2
        // Predicated region
        $region45: #{tpu_custom_call.1} parent=43 // pred_check
          %p357 = pneg %p152
        $region46: #{tpu_custom_call.1} parent=43 // pred_check_branch
          %359 = sbr.rel (%p357) target = $region48
        $region47: #{tpu_custom_call.1} parent=43 // pred_region
          %s360 = sand.u32 %s137, 1
          %s361 = scalar_lea.sflag [#allocation3], %s360
          %s362 = sand.u32 %s137, 1
          %s363 = smul.addr %s362, 8
          %s364 = scalar_lea.vmem [#allocation2], %s363
          %365 = dma.done %s361, 128
        $region48: #{tpu_custom_call.1} parent=43 // pred_fallthru
          _
      $region44: #{tpu_custom_call.1} parent=5 // pred_fallthru
        _
    $region6: #{tpu_custom_call.1} parent=1 // loop_footer
      %s17 = sadd.s32 1, %s13
    $region7: #{tpu_custom_call.1} parent=1 // loop_footer_branch
      %12 = sbr.rel target = $region3
    $region8: #{tpu_custom_call.1} parent=1 // loop_exit
      _
    %366 = vsyncpa [#allocation3], 1
    %s367 = scalar_lea.sflag [#allocation3], 1
    %368 = vsyncpa %s367, 1

</llo_original>
